<compile_context>
chip_gen: v7x
topology: tpu7x:2x2x1
jax: 0.10.0
libtpu: 0.0.40
codegen_flags: <defaults>
</compile_context>

<pallas_src>
import jax
import jax.numpy as jnp
from jax import lax
from jax.experimental import pallas as pl
from jax.experimental.pallas import tpu as pltpu

EPS = 1e-5


# --------------------------------------------------------------------------- #
# Tiling / VMEM planning (generation aware: 128 MiB on v5e/v6e, 64 MiB on v7x) #
# --------------------------------------------------------------------------- #
def _vmem_capacity_bytes():
    try:
        return int(pltpu.get_tpu_info().vmem_capacity_bytes)
    except Exception:
        return 64 * 1024 * 1024  # conservative default (v7x per-TensorCore VMEM)


def _plan(N, C_in, C_out, HW, vmem_cap):
    """Returns (Nb, T, vmem_limit_bytes) for the streaming two-pass path."""
    # Scoped VMEM limit: ~3/4 of physical, capped (review: ~48 MiB on v7x,
    # up to ~100 MiB on v5e/v6e).
    vmem_limit = min(vmem_cap * 3 // 4, 100 * 1024 * 1024)
    # Budget for the pipelined blocks; headroom left for Mosaic scratch.
    block_budget = vmem_limit * 3 // 5
    # Bytes per lane-column of one grid step: double-buffered x input (2*C_in),
    # double-buffered output (2*C_out) and one (C_out, T) f32 intermediate.
    bytes_per_col = 4 * (2 * C_in + 3 * C_out)
    max_cols = max(block_budget // bytes_per_col, 128)
    max_cols = min(max_cols, 512 * 1024)   # >8 MB/step has diminishing returns

    if HW % 128 == 0:
        # Largest multiple of 128 that divides HW and fits the budget.
        t = 128
        cap = min(HW, (max_cols // 128) * 128)
        for cand in range(cap, 127, -128):
            if HW % cand == 0:
                t = cand
                break
    else:
        # Only the full spatial extent is a legal non-128-multiple block.
        t = HW

    nb = 1
    if t == HW:
        # Whole image per step: merge several images per block so each DMA is
        # big and the store stays lane-dense where possible.
        max_nb = max(min(N, 16, max_cols // max(HW, 1)), 1)
        for cand in range(max_nb, 0, -1):
            if N % cand == 0:
                nb = cand
                break
    return nb, t, int(vmem_limit)


def _fits_fused(N, C_in, C_out, HW, vmem_limit):
    x_bytes = 4 * N * C_in * HW
    out_bytes = 4 * N * C_out * HW
    inter_bytes = 8 * C_out * HW           # per-image f32 intermediates
    return x_bytes + out_bytes + inter_bytes + (4 << 20) <= vmem_limit


# --------------------------------------------------------------------------- #
# Kernels                                                                      #
# --------------------------------------------------------------------------- #
def _fused_kernel(x_ref, w_ref, b_ref, gamma_ref, beta_ref, o_ref):
    """Single-pass path: all of x resident in VMEM (one HBM read of x)."""
    n_img, c_in, hw = x_ref.shape
    w = w_ref[...]                                   # (C_out, C_in)
    b = b_ref[...]                                   # (C_out, 1)

    def stats_body(i, carry):
        g, s = carry
        xi = x_ref[i]                                # (C_in, HW)
        g = g + lax.dot_general(xi, xi, (((1,), (1,)), ((), ())),
                                preferred_element_type=jnp.float32)
        s = s + jnp.sum(xi, axis=1, keepdims=True)
        return g, s

    g, s = lax.fori_loop(
        0, n_img, stats_body,
        (jnp.zeros((c_in, c_in), jnp.float32), jnp.zeros((c_in, 1), jnp.float32)))

    r = jnp.float32(n_img * hw)
    ws = jnp.dot(w, s, preferred_element_type=jnp.float32)          # (C_out, 1)
    wg = jnp.dot(w, g, preferred_element_type=jnp.float32)          # (C_out, C_in)
    sum_y = ws + r * b
    sum_y2 = jnp.sum(wg * w, axis=1, keepdims=True) + 2.0 * b * ws + r * b * b
    mean = sum_y / r
    # TODO(synk): E[y^2]-E[y]^2 in f32 can cancel for large/strongly-biased
    # activations; a shifted-moment variant would be more robust.
    var = jnp.maximum(sum_y2 / r - mean * mean, 0.0)
    scale = gamma_ref[...] * lax.rsqrt(var + EPS)
    w_hat = w * scale
    b_hat = (b - mean) * scale + beta_ref[...]

    @pl.loop(0, n_img)
    def _(i):
        y = jnp.dot(w_hat, x_ref[i], preferred_element_type=jnp.float32) + b_hat
        o_ref[i] = y.astype(o_ref.dtype)


def _stats_kernel(x_ref, g_ref, s_ref):
    """Pass 1: partial s = sum(x) and Gram G = x x^T per batch slice, on MXU."""
    @pl.when(pl.program_id(1) == 0)
    def _():
        g_ref[...] = jnp.zeros_like(g_ref)
        s_ref[...] = jnp.zeros_like(s_ref)

    nb, c_in, _ = x_ref.shape
    g = jnp.zeros((c_in, c_in), jnp.float32)
    s = jnp.zeros((c_in, 1), jnp.float32)
    for i in range(nb):                              # nb <= 16, unrolled
        xi = x_ref[i]                                # (C_in, T)
        g = g + lax.dot_general(xi, xi, (((1,), (1,)), ((), ())),
                                preferred_element_type=jnp.float32)
        s = s + jnp.sum(xi, axis=1, keepdims=True)
    g_ref[0] += g
    s_ref[0] += s


def _norm_kernel(x_ref, w_ref, b_ref, o_ref):
    """Pass 2: folded conv+BN, out = w_hat @ x + b_hat (lane-dense store)."""
    w = w_ref[...]
    b = b_ref[...]
    for i in range(x_ref.shape[0]):                  # <= 16, unrolled
        y = jnp.dot(w, x_ref[i], preferred_element_type=jnp.float32) + b
        o_ref[i] = y.astype(o_ref.dtype)


# --------------------------------------------------------------------------- #
# Wrapper                                                                      #
# --------------------------------------------------------------------------- #
def out_conv_forward(x, conv_w, conv_b, bn_gamma, bn_beta, *, force_two_pass=False):
    """x: (N, C_in, H, W) f32 -> BatchNorm2d(Conv2d_1x1(x)), training-mode stats."""
    N, C_in, H, W = x.shape
    C_out = conv_w.shape[0]
    HW = H * W
    R = N * HW

    x3 = x.reshape(N, C_in, HW).astype(jnp.float32)       # free reshape, no transpose
    w = conv_w.reshape(C_out, C_in).astype(jnp.float32)
    b = conv_b.reshape(C_out, 1).astype(jnp.float32)
    gamma = bn_gamma.reshape(C_out, 1).astype(jnp.float32)
    beta = bn_beta.reshape(C_out, 1).astype(jnp.float32)

    vmem_cap = _vmem_capacity_bytes()
    Nb, T, vmem_limit = _plan(N, C_in, C_out, HW, vmem_cap)

    # ---------------- Fast path: x fits in VMEM -> single HBM read of x. -----
    if not force_two_pass and _fits_fused(N, C_in, C_out, HW, vmem_limit):
        y3 = pl.pallas_call(
            _fused_kernel,
            out_shape=jax.ShapeDtypeStruct((N, C_out, HW), jnp.float32),
            compiler_params=pltpu.CompilerParams(vmem_limit_bytes=vmem_limit),
        )(x3, w, b, gamma, beta)
        return y3.reshape(N, C_out, H, W)

    # ---------------- Two-pass streaming path. -------------------------------
    NG = N // Nb
    grid = (NG, HW // T)
    x_spec = pl.BlockSpec((Nb, C_in, T), lambda n, t: (n, 0, t))

    # Pass 1: s = sum(x), G = x x^T; partials per batch slice ("parallel" axis 0
    # lets both v7x TensorCores stream x), accumulated across the spatial axis.
    g_parts, s_parts = pl.pallas_call(
        _stats_kernel,
        out_shape=(jax.ShapeDtypeStruct((NG, C_in, C_in), jnp.float32),
                   jax.ShapeDtypeStruct((NG, C_in, 1), jnp.float32)),
        grid=grid,
        in_specs=[x_spec],
        out_specs=(pl.BlockSpec((1, C_in, C_in), lambda n, t: (n, 0, 0)),
                   pl.BlockSpec((1, C_in, 1), lambda n, t: (n, 0, 0))),
        compiler_params=pltpu.CompilerParams(
            dimension_semantics=("parallel", "arbitrary"),
            vmem_limit_bytes=vmem_limit),
    )(x3)

    g = jnp.sum(g_parts, axis=0)                          # (C_in, C_in)
    s = jnp.sum(s_parts, axis=0)                          # (C_in, 1)

    # Fold BN (training-mode batch stats) into the conv in the wrapper.
    ws = jnp.dot(w, s)                                    # (C_out, 1)
    sum_y = ws + R * b
    sum_y2 = jnp.sum(jnp.dot(w, g) * w, axis=1, keepdims=True) + 2.0 * b * ws + R * b * b
    mean = sum_y / R
    # TODO(synk): E[y^2]-E[y]^2 can cancel in f32 for large/strongly-biased activations.
    var = jnp.maximum(sum_y2 / R - mean * mean, 0.0)
    scale = gamma * jax.lax.rsqrt(var + EPS)
    w_hat = w * scale
    b_hat = (b - mean) * scale + beta

    # Pass 2: out = w_hat @ x + b_hat, streamed at HBM roofline; both grid axes
    # independent -> "parallel" (v7x shards across its two TensorCores).
    y3 = pl.pallas_call(
        _norm_kernel,
        out_shape=jax.ShapeDtypeStruct((N, C_out, HW), jnp.float32),
        grid=grid,
        in_specs=[x_spec,
                  pl.BlockSpec((C_out, C_in), lambda n, t: (0, 0)),
                  pl.BlockSpec((C_out, 1), lambda n, t: (0, 0))],
        out_specs=pl.BlockSpec((Nb, C_out, T), lambda n, t: (n, 0, t)),
        compiler_params=pltpu.CompilerParams(
            dimension_semantics=("parallel", "parallel"),
            vmem_limit_bytes=vmem_limit),
    )(x3, w_hat, b_hat)

    # TODO(synk): BatchNorm2d training mode also updates running_mean /
    # running_var (unbiased); only the normalized forward output is produced.
    return y3.reshape(N, C_out, H, W)


def _reference(x, conv_w, conv_b, bn_gamma, bn_beta):
    # Pure-JAX reference for sanity checking.
    C_out, C_in = conv_w.shape[0], conv_w.shape[1]
    y = jnp.einsum("nchw,oc->nohw", x, conv_w.reshape(C_out, C_in)) + conv_b[None, :, None, None]
    mean = jnp.mean(y, axis=(0, 2, 3), keepdims=True)
    var = jnp.mean((y - mean) ** 2, axis=(0, 2, 3), keepdims=True)
    return (y - mean) / jnp.sqrt(var + EPS) * bn_gamma[None, :, None, None] + bn_beta[None, :, None, None]


if __name__ == "__main__":
    key = jax.random.PRNGKey(0)
    N, C_in, C_out, H, W = 2, 4, 4, 16, 16

    k_x, k_w, k_b = jax.random.split(key, 3)
    x = jax.random.normal(k_x, (N, C_in, H, W), dtype=jnp.float32)

    # Parameter init per nn.Conv2d(C_in, C_out, 1) + nn.BatchNorm2d(C_out).
    bound = 1.0 / (C_in ** 0.5)
    conv_w = jax.random.uniform(k_w, (C_out, C_in, 1, 1), minval=-bound, maxval=bound,
                                dtype=jnp.float32)
    conv_b = jax.random.uniform(k_b, (C_out,), minval=-bound, maxval=bound,
                                dtype=jnp.float32)
    bn_gamma = jnp.ones((C_out,), dtype=jnp.float32)   # BatchNorm2d default weight
    bn_beta = jnp.zeros((C_out,), dtype=jnp.float32)   # BatchNorm2d default bias

    ref = _reference(x, conv_w, conv_b, bn_gamma, bn_beta)

    # Fast (VMEM-resident, single HBM read of x) path.
    out_fused = jax.block_until_ready(
        out_conv_forward(x, conv_w, conv_b, bn_gamma, bn_beta))
    # Streaming two-pass path (exercised explicitly so both code paths compile).
    out_tiled = jax.block_until_ready(
        out_conv_forward(x, conv_w, conv_b, bn_gamma, bn_beta, force_two_pass=True))

    assert out_fused.shape == (N, C_out, H, W)
    assert jnp.allclose(out_fused, ref, atol=1e-4, rtol=1e-4)
    assert jnp.allclose(out_tiled, ref, atol=1e-4, rtol=1e-4)

    print("KERNEL_OK")
</pallas_src>

<mosaic_0001>
module attributes {stable_mosaic.version = 11 : i64} {
  func.func @_fused_kernel(%arg0: memref<2x4x256xf32, #tpu.memory_space<vmem>>, %arg1: memref<4x4xf32, #tpu.memory_space<vmem>>, %arg2: memref<4x1xf32, #tpu.memory_space<vmem>>, %arg3: memref<4x1xf32, #tpu.memory_space<vmem>>, %arg4: memref<4x1xf32, #tpu.memory_space<vmem>>, %arg5: memref<2x4x256xf32, #tpu.memory_space<vmem>>) attributes {dimension_semantics = [], scalar_prefetch = 0 : i64, scratch_operands = 0 : i64, tpu.core_type = #tpu.core_type<tc>} {
    %c0 = arith.constant 0 : index
    %c0_0 = arith.constant 0 : index
    %0 = vector.load %arg1[%c0, %c0_0] : memref<4x4xf32, #tpu.memory_space<vmem>>, vector<4x4xf32>
    %c0_1 = arith.constant 0 : index
    %c0_2 = arith.constant 0 : index
    %1 = vector.load %arg2[%c0_1, %c0_2] : memref<4x1xf32, #tpu.memory_space<vmem>>, vector<4x1xf32>
    %cst = arith.constant 0.000000e+00 : f32
    %2 = vector.broadcast %cst : f32 to vector<4x4xf32>
    %cst_3 = arith.constant 0.000000e+00 : f32
    %3 = vector.broadcast %cst_3 : f32 to vector<4x1xf32>
    %c0_i32 = arith.constant 0 : i32
    %c2_i32 = arith.constant 2 : i32
    %4 = arith.addi %c0_i32, %c2_i32 : i32
    %c1_i32 = arith.constant 1 : i32
    %5:2 = scf.for %arg6 = %c0_i32 to %4 step %c1_i32 iter_args(%arg7 = %2, %arg8 = %3) -> (vector<4x4xf32>, vector<4x1xf32>)  : i32 {
      %42 = arith.index_cast %arg6 : i32 to index
      %c0_23 = arith.constant 0 : index
      %c0_24 = arith.constant 0 : index
      %43 = vector.load %arg0[%42, %c0_23, %c0_24] : memref<2x4x256xf32, #tpu.memory_space<vmem>>, vector<1x4x256xf32>
      %44 = vector.shape_cast %43 : vector<1x4x256xf32> to vector<4x256xf32>
      %cst_25 = arith.constant dense<0.000000e+00> : vector<4x4xf32>
      %45 = tpu.matmul %44, %44, %cst_25 {dimension_numbers = #tpu.dot_dimension_numbers<[1], [1], [0], [0], [0, 0, 1, 0], [], []>} : vector<4x256xf32>, vector<4x256xf32>, vector<4x4xf32> -> vector<4x4xf32>
      %46 = arith.addf %arg7, %45 : vector<4x4xf32>
      %cst_26 = arith.constant dense<0.000000e+00> : vector<4xf32>
      %47 = vector.multi_reduction <add>, %44, %cst_26 [1] : vector<4x256xf32> to vector<4xf32>
      %48 = vector.shape_cast %47 : vector<4xf32> to vector<4x1xf32>
      %49 = arith.addf %arg8, %48 : vector<4x1xf32>
      scf.yield %46, %49 : vector<4x4xf32>, vector<4x1xf32>
    }
    %c2_i32_4 = arith.constant 2 : i32
    %cst_5 = arith.constant dense<0.000000e+00> : vector<4x1xf32>
    %6 = tpu.matmul %0, %5#1, %cst_5 {dimension_numbers = #tpu.dot_dimension_numbers<[1], [0], [0], [1], [0, 0, 1, 1], [], []>} : vector<4x4xf32>, vector<4x1xf32>, vector<4x1xf32> -> vector<4x1xf32>
    %cst_6 = arith.constant dense<0.000000e+00> : vector<4x4xf32>
    %7 = tpu.matmul %0, %5#0, %cst_6 {dimension_numbers = #tpu.dot_dimension_numbers<[1], [0], [0], [1], [0, 0, 1, 1], [], []>} : vector<4x4xf32>, vector<4x4xf32>, vector<4x4xf32> -> vector<4x4xf32>
    %cst_7 = arith.constant 5.120000e+02 : f32
    %8 = vector.broadcast %cst_7 : f32 to vector<4x1xf32>
    %9 = arith.mulf %8, %1 : vector<4x1xf32>
    %10 = arith.addf %6, %9 : vector<4x1xf32>
    %11 = arith.mulf %7, %0 : vector<4x4xf32>
    %cst_8 = arith.constant dense<0.000000e+00> : vector<4xf32>
    %12 = vector.multi_reduction <add>, %11, %cst_8 [1] : vector<4x4xf32> to vector<4xf32>
    %13 = vector.shape_cast %12 : vector<4xf32> to vector<4x1xf32>
    %cst_9 = arith.constant 2.000000e+00 : f32
    %14 = vector.broadcast %cst_9 : f32 to vector<4x1xf32>
    %15 = arith.mulf %14, %1 : vector<4x1xf32>
    %16 = arith.mulf %15, %6 : vector<4x1xf32>
    %17 = arith.addf %13, %16 : vector<4x1xf32>
    %cst_10 = arith.constant 5.120000e+02 : f32
    %18 = vector.broadcast %cst_10 : f32 to vector<4x1xf32>
    %19 = arith.mulf %18, %1 : vector<4x1xf32>
    %20 = arith.mulf %19, %1 : vector<4x1xf32>
    %21 = arith.addf %17, %20 : vector<4x1xf32>
    %cst_11 = arith.constant 5.120000e+02 : f32
    %22 = vector.broadcast %cst_11 : f32 to vector<4x1xf32>
    %23 = arith.divf %10, %22 : vector<4x1xf32>
    %cst_12 = arith.constant 5.120000e+02 : f32
    %24 = vector.broadcast %cst_12 : f32 to vector<4x1xf32>
    %25 = arith.divf %21, %24 : vector<4x1xf32>
    %26 = arith.mulf %23, %23 : vector<4x1xf32>
    %27 = arith.subf %25, %26 : vector<4x1xf32>
    %cst_13 = arith.constant 0.000000e+00 : f32
    %28 = vector.broadcast %cst_13 : f32 to vector<4x1xf32>
    %29 = arith.maximumf %27, %28 : vector<4x1xf32>
    %c0_14 = arith.constant 0 : index
    %c0_15 = arith.constant 0 : index
    %30 = vector.load %arg3[%c0_14, %c0_15] : memref<4x1xf32, #tpu.memory_space<vmem>>, vector<4x1xf32>
    %cst_16 = arith.constant 9.99999974E-6 : f32
    %31 = vector.broadcast %cst_16 : f32 to vector<4x1xf32>
    %32 = arith.addf %29, %31 : vector<4x1xf32>
    %33 = math.rsqrt %32 : vector<4x1xf32>
    %34 = arith.mulf %30, %33 : vector<4x1xf32>
    %35 = vector.broadcast %34 : vector<4x1xf32> to vector<4x4xf32>
    %36 = arith.mulf %0, %35 : vector<4x4xf32>
    %37 = arith.subf %1, %23 : vector<4x1xf32>
    %38 = arith.mulf %37, %34 : vector<4x1xf32>
    %c0_17 = arith.constant 0 : index
    %c0_18 = arith.constant 0 : index
    %39 = vector.load %arg4[%c0_17, %c0_18] : memref<4x1xf32, #tpu.memory_space<vmem>>, vector<4x1xf32>
    %40 = arith.addf %38, %39 : vector<4x1xf32>
    %c0_i32_19 = arith.constant 0 : i32
    %c2_i32_20 = arith.constant 2 : i32
    %41 = arith.addi %c0_i32_19, %c2_i32_20 : i32
    %c1_i32_21 = arith.constant 1 : i32
    scf.for %arg6 = %c0_i32_19 to %41 step %c1_i32_21  : i32 {
      %c1_i32_23 = arith.constant 1 : i32
      %42 = arith.muli %arg6, %c1_i32_23 : i32
      %c0_i32_24 = arith.constant 0 : i32
      %43 = arith.addi %c0_i32_24, %42 : i32
      %44 = arith.index_cast %43 : i32 to index
      %c0_25 = arith.constant 0 : index
      %c0_26 = arith.constant 0 : index
      %45 = vector.load %arg0[%44, %c0_25, %c0_26] : memref<2x4x256xf32, #tpu.memory_space<vmem>>, vector<1x4x256xf32>
      %46 = vector.shape_cast %45 : vector<1x4x256xf32> to vector<4x256xf32>
      %cst_27 = arith.constant dense<0.000000e+00> : vector<4x256xf32>
      %47 = tpu.matmul %36, %46, %cst_27 {dimension_numbers = #tpu.dot_dimension_numbers<[1], [0], [0], [1], [0, 0, 1, 1], [], []>} : vector<4x4xf32>, vector<4x256xf32>, vector<4x256xf32> -> vector<4x256xf32>
      %48 = vector.broadcast %40 : vector<4x1xf32> to vector<4x256xf32>
      %49 = arith.addf %47, %48 : vector<4x256xf32>
      %50 = arith.index_cast %43 : i32 to index
      %c0_28 = arith.constant 0 : index
      %c0_29 = arith.constant 0 : index
      %51 = vector.load %arg5[%50, %c0_28, %c0_29] : memref<2x4x256xf32, #tpu.memory_space<vmem>>, vector<1x4x256xf32>
      %52 = vector.shape_cast %51 : vector<1x4x256xf32> to vector<4x256xf32>
      %53 = vector.shape_cast %49 : vector<4x256xf32> to vector<1x4x256xf32>
      tpu.vector_store %arg5[%50, %c0_28, %c0_29], %53 {strides = array<i32>} : memref<2x4x256xf32, #tpu.memory_space<vmem>>, vector<1x4x256xf32>,
    }
    %c2_i32_22 = arith.constant 2 : i32
    return
  }
}

</mosaic_0001>

<llo_original>
// kernel: tpu_custom_call.1
$region0: #{tpu_custom_call.1}
  #allocation0 [shape = 'u32[]', space=smem, size = 0x4, offset = 0x4, fixed_abs, tag = 'smem constant byte address 0x4 - core index']
  #allocation1 [shape = 'u32[144,128]{1,0:T(1,128)}', space=vmem, size = 0x12000, scoped, tag = 'internal scratch']
  %s0 = inlined_call_operand.hbm [shape: f32[2,4,256], index: 0, kind: input, shape index: {}]
  %s1 = inlined_call_operand.vmem [shape: f32[4,4], index: 1, kind: input, shape index: {}]
  %s2 = inlined_call_operand.vmem [shape: f32[4,1], index: 2, kind: input, shape index: {}]
  %s3 = inlined_call_operand.vmem [shape: f32[4,1], index: 3, kind: input, shape index: {}]
  %s4 = inlined_call_operand.vmem [shape: f32[4,1], index: 4, kind: input, shape index: {}]
  %s5 = inlined_call_operand.hbm [shape: f32[2,4,256], index: 5, kind: output, shape index: {}]
  %s6 = sld [smem:[#allocation0]]
  $region48: #{tpu_custom_call.1} parent=0
    _
  %s8 = ssub.s32 1, %s6
  %s9 = scalar_select 0, %s8, %s6
  $region1: #{tpu_custom_call.1} parent=0
    #allocation2 [shape = 'u8[8192]{0}', space=vmem, size = 0x2000, scoped, tag = 'input window, operand 0, single buffered']
    #allocation3 [shape = 's32[1]{0}', space=sflag, size = 0x4, scoped, tag = 'scoped memory for tpu_custom_call.1']
    #allocation4 [shape = 's32[1]{0}', space=sflag, size = 0x4, scoped, tag = 'scoped memory for tpu_custom_call.1']
    #allocation5 [shape = 'u8[8192]{0}', space=vmem, size = 0x2000, scoped, tag = 'output window, operand 0, single buffered']
    %10 = vsyncpa [#allocation3], 0
    %11 = vsyncpa [#allocation4], 0
    // Predicated region
    $region2: #{tpu_custom_call.1} parent=1 // pred_check
      _
    $region3: #{tpu_custom_call.1} parent=1 // pred_check_branch
      %13 = sbr.rel (0) target = $region5
    $region4: #{tpu_custom_call.1} parent=1 // pred_region
      %s15 = ssub.s32 256, 256
      %16 = vsyncadd [#allocation3], %s15
      %s17 = sshll.u32 [#allocation2], 4
      %s18 = int_to_ptr.vmem [resolvable:$true] %s17
      %23 = dma.hbm_to_vmem [thread:$0]  %s0, 256, %s18, [#allocation3], 128, 128, 8
    $region5: #{tpu_custom_call.1} parent=1 // pred_fallthru
      _
    // Predicated region
    $region6: #{tpu_custom_call.1} parent=1 // pred_check
      _
    $region7: #{tpu_custom_call.1} parent=1 // pred_check_branch
      %25 = sbr.rel (0) target = $region9
    $region8: #{tpu_custom_call.1} parent=1 // pred_region
      _
    $region9: #{tpu_custom_call.1} parent=1 // pred_fallthru
      _
    // Predicated region
    $region10: #{tpu_custom_call.1} parent=1 // pred_check
      _
    $region11: #{tpu_custom_call.1} parent=1 // pred_check_branch
      %27 = sbr.rel (0) target = $region13
    $region12: #{tpu_custom_call.1} parent=1 // pred_region
      _
    $region13: #{tpu_custom_call.1} parent=1 // pred_fallthru
      _
    // Predicated region
    $region14: #{tpu_custom_call.1} parent=1 // pred_check
      _
    $region15: #{tpu_custom_call.1} parent=1 // pred_check_branch
      %29 = sbr.rel (0) target = $region17
    $region16: #{tpu_custom_call.1} parent=1 // pred_region
      _
    $region17: #{tpu_custom_call.1} parent=1 // pred_fallthru
      _
    // Predicated region
    $region18: #{tpu_custom_call.1} parent=1 // pred_check
      _
    $region19: #{tpu_custom_call.1} parent=1 // pred_check_branch
      %31 = sbr.rel (0) target = $region21
    $region20: #{tpu_custom_call.1} parent=1 // pred_region
      _
    $region21: #{tpu_custom_call.1} parent=1 // pred_fallthru
      _
    // Predicated region
    $region22: #{tpu_custom_call.1} parent=1 // pred_check
      _
    $region23: #{tpu_custom_call.1} parent=1 // pred_check_branch
      %33 = sbr.rel (0) target = $region25
    $region24: #{tpu_custom_call.1} parent=1 // pred_region
      %34 = dma.done [#allocation3], 256
    $region25: #{tpu_custom_call.1} parent=1 // pred_fallthru
      _
    %v35 = vld [vmem:[%s1] sm:$0xf]
    %v36 = vld [vmem:[%s2] sm:$0xf]
    loop: start=0, step=1, limit=2
    $region26: #{tpu_custom_call.1} parent=1 // loop_pre_header
      _
    $region27: #{tpu_custom_call.1} parent=1 // loop_header
      %s38 = sphi 0, %s42
      %p39 = scmp.ge.s32.totalorder %s38, 2
      %v43 = vphi 0.0, %v122
      %v44 = vphi 0.0, %v129
    $region28: #{tpu_custom_call.1} parent=1 // loop_header_branch
      %41 = sbr.rel (%p39) target = $region32
    $region29: #{tpu_custom_call.1} parent=1 // loop_body
      %s45 = smul.u32 %s38, 2
      %s46 = smul.addr %s45, 4
      %s47 = scalar_lea.vmem [#allocation2], %s46
      %v48 = vld [vmem:[%s47] sm:$0xff]
      %v50 = vcombine.high %v48, %v48
      %52 = vmatprep.subr.mxu0 %v50
      %53 = vmatpush1.xpose.msra.mxu0 %v48
      %54 = vmatprep.subr.mxu0 0.0
      %55 = vmatpush1.xpose.msra.mxu0 0.0
      %56 = vmatprep.subr.mxu0 0.0
      %57 = vmatpush1.xpose.msra.mxu0 0.0
      %58 = vmatprep.subr.mxu0 0.0
      %59 = vmatpush1.xpose.msra.mxu0 0.0
      %60 = vmatprep.subr.mxu0 0.0
      %61 = vmatpush1.xpose.msra.mxu0 0.0
      %62 = vmatprep.subr.mxu0 0.0
      %63 = vmatpush1.xpose.msra.mxu0 0.0
      %64 = vmatprep.subr.mxu0 0.0
      %65 = vmatpush1.xpose.msra.mxu0 0.0
      %66 = vmatprep.subr.mxu0 0.0
      %67 = vmatpush1.xpose.msra.mxu0 0.0
      %68 = vmatprep.subr.mxu0 0.0
      %69 = vmatpush1.xpose.msra.mxu0 0.0
      %70 = vmatprep.subr.mxu0 0.0
      %71 = vmatpush1.xpose.msra.mxu0 0.0
      %72 = vmatprep.subr.mxu0 0.0
      %73 = vmatpush1.xpose.msra.mxu0 0.0
      %74 = vmatprep.subr.mxu0 0.0
      %75 = vmatpush1.xpose.msra.mxu0 0.0
      %76 = vmatprep.subr.mxu0 0.0
      %77 = vmatpush1.xpose.msra.mxu0 0.0
      %78 = vmatprep.subr.mxu0 0.0
      %79 = vmatpush1.xpose.msra.mxu0 0.0
      %80 = vmatprep.subr.mxu0 0.0
      %81 = vmatpush1.xpose.msra.mxu0 0.0
      %82 = vmatprep.subr.mxu0 0.0
      %83 = vmatpush1.xpose.msra.mxu0 0.0
      %84 = vmatprep.subr.mxu0 0.0
      %85 = vmatpush1.xpose.msra.mxu0 0.0
      %86 = vmatprep.subr.mxu0 0.0
      %87 = vmatpush1.xpose.msra.mxu0 0.0
      %88 = vmatprep.subr.mxu0 0.0
      %89 = vmatpush1.xpose.msra.mxu0 0.0
      %90 = vmatprep.subr.mxu0 0.0
      %91 = vmatpush1.xpose.msra.mxu0 0.0
      %92 = vmatprep.subr.mxu0 0.0
      %93 = vmatpush1.xpose.msra.mxu0 0.0
      %94 = vmatprep.subr.mxu0 0.0
      %95 = vmatpush1.xpose.msra.mxu0 0.0
      %96 = vmatprep.subr.mxu0 0.0
      %97 = vmatpush1.xpose.msra.mxu0 0.0
      %98 = vmatprep.subr.mxu0 0.0
      %99 = vmatpush1.xpose.msra.mxu0 0.0
      %100 = vmatprep.subr.mxu0 0.0
      %101 = vmatpush1.xpose.msra.mxu0 0.0
      %102 = vmatprep.subr.mxu0 0.0
      %103 = vmatpush1.xpose.msra.mxu0 0.0
      %104 = vmatprep.subr.mxu0 0.0
      %105 = vmatpush1.xpose.msra.mxu0 0.0
      %106 = vmatprep.subr.mxu0 0.0
      %107 = vmatpush1.xpose.msra.mxu0 0.0
      %108 = vmatprep.subr.mxu0 0.0
      %109 = vmatpush1.xpose.msra.mxu0 0.0
      %110 = vmatprep.subr.mxu0 0.0
      %111 = vmatpush1.xpose.msra.mxu0 0.0
      %112 = vmatprep.subr.mxu0 0.0
      %113 = vmatpush1.xpose.msra.mxu0 0.0
      %114 = vmatprep.subr.mxu0 0.0
      %115 = vmatpush1.xpose.msra.mxu0 0.0
      %116 = vmatprep.mubr.f32.mxu0 %v50
      %117 = vmatmul.mubr.f32.gmra.mrb[0].mxu0 %v48
      %v118 = vpop.f32.mrb[0].mxu0
      %v119 = vadd.f32 0.0, %v118
      %v120 = vpop.f32.mrb[0].mxu0
      %121 = vdwg.mxu0
      %v122 = vadd.f32 %v43, %v119
      %vm123 = vcmask 1043456
      %v124 = vsel %vm123, %v48, 0.0
      %v125 = vsel %vm123, %v50, 0.0
      %v126 = vadd.f32 %v124, %v125
      %127 = vadd.xlane.f32.xlu0 %v126
      %v128 = vpop.xlane.xlu0 %127
      %v129 = vadd.f32 %v44, %v128
    $region30: #{tpu_custom_call.1} parent=1 // loop_footer
      %s42 = sadd.s32 1, %s38
    $region31: #{tpu_custom_call.1} parent=1 // loop_footer_branch
      %37 = sbr.rel target = $region27
    $region32: #{tpu_custom_call.1} parent=1 // loop_exit
      _
    %vm130 = vcmask 31744
    %v132 = vsel %vm130, %v35, 0
    %vm134 = vcmask 1043456
    %v136 = vsel %vm134, %v44, 0
    %138 = vmatprep.subr.mxu0 0.0
    %139 = vmatpush1.msra.mxu0 %v136
    %140 = vmatprep.subr.mxu0 0.0
    %141 = vmatpush1.msra.mxu0 0.0
    %142 = vmatprep.subr.mxu0 0.0
    %143 = vmatpush1.msra.mxu0 0.0
    %144 = vmatprep.subr.mxu0 0.0
    %145 = vmatpush1.msra.mxu0 0.0
    %146 = vmatprep.subr.mxu0 0.0
    %147 = vmatpush1.msra.mxu0 0.0
    %148 = vmatprep.subr.mxu0 0.0
    %149 = vmatpush1.msra.mxu0 0.0
    %150 = vmatprep.subr.mxu0 0.0
    %151 = vmatpush1.msra.mxu0 0.0
    %152 = vmatprep.subr.mxu0 0.0
    %153 = vmatpush1.msra.mxu0 0.0
    %154 = vmatprep.subr.mxu0 0.0
    %155 = vmatpush1.msra.mxu0 0.0
    %156 = vmatprep.subr.mxu0 0.0
    %157 = vmatpush1.msra.mxu0 0.0
    %158 = vmatprep.subr.mxu0 0.0
    %159 = vmatpush1.msra.mxu0 0.0
    %160 = vmatprep.subr.mxu0 0.0
    %161 = vmatpush1.msra.mxu0 0.0
    %162 = vmatprep.subr.mxu0 0.0
    %163 = vmatpush1.msra.mxu0 0.0
    %164 = vmatprep.subr.mxu0 0.0
    %165 = vmatpush1.msra.mxu0 0.0
    %166 = vmatprep.subr.mxu0 0.0
    %167 = vmatpush1.msra.mxu0 0.0
    %168 = vmatprep.subr.mxu0 0.0
    %169 = vmatpush1.msra.mxu0 0.0
    %170 = vmatprep.subr.mxu0 0.0
    %171 = vmatpush1.msra.mxu0 0.0
    %172 = vmatprep.subr.mxu0 0.0
    %173 = vmatpush1.msra.mxu0 0.0
    %174 = vmatprep.subr.mxu0 0.0
    %175 = vmatpush1.msra.mxu0 0.0
    %176 = vmatprep.subr.mxu0 0.0
    %177 = vmatpush1.msra.mxu0 0.0
    %178 = vmatprep.subr.mxu0 0.0
    %179 = vmatpush1.msra.mxu0 0.0
    %180 = vmatprep.subr.mxu0 0.0
    %181 = vmatpush1.msra.mxu0 0.0
    %182 = vmatprep.subr.mxu0 0.0
    %183 = vmatpush1.msra.mxu0 0.0
    %184 = vmatprep.subr.mxu0 0.0
    %185 = vmatpush1.msra.mxu0 0.0
    %186 = vmatprep.subr.mxu0 0.0
    %187 = vmatpush1.msra.mxu0 0.0
    %188 = vmatprep.subr.mxu0 0.0
    %189 = vmatpush1.msra.mxu0 0.0
    %190 = vmatprep.subr.mxu0 0.0
    %191 = vmatpush1.msra.mxu0 0.0
    %192 = vmatprep.subr.mxu0 0.0
    %193 = vmatpush1.msra.mxu0 0.0
    %194 = vmatprep.subr.mxu0 0.0
    %195 = vmatpush1.msra.mxu0 0.0
    %196 = vmatprep.subr.mxu0 0.0
    %197 = vmatpush1.msra.mxu0 0.0
    %198 = vmatprep.subr.mxu0 0.0
    %199 = vmatpush1.msra.mxu0 0.0
    %200 = vmatprep.subr.mxu0 0.0
    %201 = vmatpush1.msra.mxu0 0.0
    %202 = vmatprep.mubr.f32.mxu0 0.0
    %203 = vmatmul.mubr.f32.gmra.mrb[0].mxu0 %v132
    %v204 = vpop.f32.mrb[0].mxu0
    %v205 = vadd.f32 0.0, %v204
    %v206 = vpop.f32.mrb[0].mxu0
    %207 = vdwg.mxu0
    %v209 = vsel %vm134, %v43, 0
    %211 = vmatprep.subr.mxu0 0.0
    %212 = vmatpush1.msra.mxu0 %v209
    %213 = vmatprep.subr.mxu0 0.0
    %214 = vmatpush1.msra.mxu0 0.0
    %215 = vmatprep.subr.mxu0 0.0
    %216 = vmatpush1.msra.mxu0 0.0
    %217 = vmatprep.subr.mxu0 0.0
    %218 = vmatpush1.msra.mxu0 0.0
    %219 = vmatprep.subr.mxu0 0.0
    %220 = vmatpush1.msra.mxu0 0.0
    %221 = vmatprep.subr.mxu0 0.0
    %222 = vmatpush1.msra.mxu0 0.0
    %223 = vmatprep.subr.mxu0 0.0
    %224 = vmatpush1.msra.mxu0 0.0
    %225 = vmatprep.subr.mxu0 0.0
    %226 = vmatpush1.msra.mxu0 0.0
    %227 = vmatprep.subr.mxu0 0.0
    %228 = vmatpush1.msra.mxu0 0.0
    %229 = vmatprep.subr.mxu0 0.0
    %230 = vmatpush1.msra.mxu0 0.0
    %231 = vmatprep.subr.mxu0 0.0
    %232 = vmatpush1.msra.mxu0 0.0
    %233 = vmatprep.subr.mxu0 0.0
    %234 = vmatpush1.msra.mxu0 0.0
    %235 = vmatprep.subr.mxu0 0.0
    %236 = vmatpush1.msra.mxu0 0.0
    %237 = vmatprep.subr.mxu0 0.0
    %238 = vmatpush1.msra.mxu0 0.0
    %239 = vmatprep.subr.mxu0 0.0
    %240 = vmatpush1.msra.mxu0 0.0
    %241 = vmatprep.subr.mxu0 0.0
    %242 = vmatpush1.msra.mxu0 0.0
    %243 = vmatprep.subr.mxu0 0.0
    %244 = vmatpush1.msra.mxu0 0.0
    %245 = vmatprep.subr.mxu0 0.0
    %246 = vmatpush1.msra.mxu0 0.0
    %247 = vmatprep.subr.mxu0 0.0
    %248 = vmatpush1.msra.mxu0 0.0
    %249 = vmatprep.subr.mxu0 0.0
    %250 = vmatpush1.msra.mxu0 0.0
    %251 = vmatprep.subr.mxu0 0.0
    %252 = vmatpush1.msra.mxu0 0.0
    %253 = vmatprep.subr.mxu0 0.0
    %254 = vmatpush1.msra.mxu0 0.0
    %255 = vmatprep.subr.mxu0 0.0
    %256 = vmatpush1.msra.mxu0 0.0
    %257 = vmatprep.subr.mxu0 0.0
    %258 = vmatpush1.msra.mxu0 0.0
    %259 = vmatprep.subr.mxu0 0.0
    %260 = vmatpush1.msra.mxu0 0.0
    %261 = vmatprep.subr.mxu0 0.0
    %262 = vmatpush1.msra.mxu0 0.0
    %263 = vmatprep.subr.mxu0 0.0
    %264 = vmatpush1.msra.mxu0 0.0
    %265 = vmatprep.subr.mxu0 0.0
    %266 = vmatpush1.msra.mxu0 0.0
    %267 = vmatprep.subr.mxu0 0.0
    %268 = vmatpush1.msra.mxu0 0.0
    %269 = vmatprep.subr.mxu0 0.0
    %270 = vmatpush1.msra.mxu0 0.0
    %271 = vmatprep.subr.mxu0 0.0
    %272 = vmatpush1.msra.mxu0 0.0
    %273 = vmatprep.subr.mxu0 0.0
    %274 = vmatpush1.msra.mxu0 0.0
    %275 = vmatprep.mubr.f32.mxu0 0.0
    %276 = vmatmul.mubr.f32.gmra.mrb[0].mxu0 %v132
    %v277 = vpop.f32.mrb[0].mxu0
    %v278 = vadd.f32 0.0, %v277
    %v279 = vpop.f32.mrb[0].mxu0
    %280 = vdwg.mxu0
    %v281 = vmul.f32 %v36, 512.0
    %v282 = vadd.f32 %v205, %v281
    %v283 = vmul.f32 %v278, %v35
    %vm284 = vcmask 27648
    %v285 = vsel %vm284, %v283, 0.0
    %286 = vadd.xlane.f32.xlu0 %v285
    %v287 = vpop.xlane.xlu0 %286
    %v288 = vmul.f32 %v36, 2.0
    %v289 = vmul.f32 %v288, %v205
    %v290 = vadd.f32 %v287, %v289
    %v291 = vmul.f32 %v281, %v36
    %v292 = vadd.f32 %v290, %v291
    %v293 = vrcp.pop 512.0
    %v294 = vmul.f32 %v282, %v293
    %v295 = vmul.f32 %v292, %v293
    %v296 = vmul.f32 %v294, %v294
    %v297 = vsub.f32 %v295, %v296
    %v298 = vmax.f32 %v297, 0.0
    %v299 = vld [vmem:[%s3] sm:$0xf]
    %v300 = vadd.f32 %v298, 1e-05
    %v301 = vrsqrt.pop %v300
    %v302 = vmul.f32 %v299, %v301
    %304 = vset.pattern.permute.xlu0 0
    %305 = vperm.xlu0 %304, %v302
    %v306 = vpop.permute.xlu0 %305
    %v308 = vmul.f32 %v35, %v306
    %v309 = vsub.f32 %v36, %v294
    %v310 = vmul.f32 %v309, %v302
    %v311 = vld [vmem:[%s4] sm:$0xf]
    %v312 = vadd.f32 %v310, %v311
    loop: start=0, step=1, limit=2
    $region33: #{tpu_custom_call.1} parent=1 // loop_pre_header
      _
    $region34: #{tpu_custom_call.1} parent=1 // loop_header
      %s314 = sphi 0, %s318
      %p315 = scmp.ge.s32.totalorder %s314, 2
    $region35: #{tpu_custom_call.1} parent=1 // loop_header_branch
      %317 = sbr.rel (%p315) target = $region39
    $region36: #{tpu_custom_call.1} parent=1 // loop_body
      %s319 = smul.u32 %s314, 2
      %s320 = smul.addr %s319, 4
      %s321 = scalar_lea.vmem [#allocation2], %s320
      %v322 = vld [vmem:[%s321] sm:$0xff]
      %324 = vset.pattern.permute.xlu0 0
      %325 = vperm.xlu0 %324, %v312
      %v326 = vpop.permute.xlu0 %325
      %v329 = vcombine.high %v322, %v322
      %v331 = vsel %vm130, %v308, 0
      %v333 = vsel %vm134, %v322, 0
      %v335 = vsel %vm134, %v329, 0
      %337 = vmatprep.subr.mxu0 %v335
      %338 = vmatpush1.msra.mxu0 %v333
      %339 = vmatprep.subr.mxu0 0.0
      %340 = vmatpush1.msra.mxu0 0.0
      %341 = vmatprep.subr.mxu0 0.0
      %342 = vmatpush1.msra.mxu0 0.0
      %343 = vmatprep.subr.mxu0 0.0
      %344 = vmatpush1.msra.mxu0 0.0
      %345 = vmatprep.subr.mxu0 0.0
      %346 = vmatpush1.msra.mxu0 0.0
      %347 = vmatprep.subr.mxu0 0.0
      %348 = vmatpush1.msra.mxu0 0.0
      %349 = vmatprep.subr.mxu0 0.0
      %350 = vmatpush1.msra.mxu0 0.0
      %351 = vmatprep.subr.mxu0 0.0
      %352 = vmatpush1.msra.mxu0 0.0
      %353 = vmatprep.subr.mxu0 0.0
      %354 = vmatpush1.msra.mxu0 0.0
      %355 = vmatprep.subr.mxu0 0.0
      %356 = vmatpush1.msra.mxu0 0.0
      %357 = vmatprep.subr.mxu0 0.0
      %358 = vmatpush1.msra.mxu0 0.0
      %359 = vmatprep.subr.mxu0 0.0
      %360 = vmatpush1.msra.mxu0 0.0
      %361 = vmatprep.subr.mxu0 0.0
      %362 = vmatpush1.msra.mxu0 0.0
      %363 = vmatprep.subr.mxu0 0.0
      %364 = vmatpush1.msra.mxu0 0.0
      %365 = vmatprep.subr.mxu0 0.0
      %366 = vmatpush1.msra.mxu0 0.0
      %367 = vmatprep.subr.mxu0 0.0
      %368 = vmatpush1.msra.mxu0 0.0
      %369 = vmatprep.subr.mxu0 0.0
      %370 = vmatpush1.msra.mxu0 0.0
      %371 = vmatprep.subr.mxu0 0.0
      %372 = vmatpush1.msra.mxu0 0.0
      %373 = vmatprep.subr.mxu0 0.0
      %374 = vmatpush1.msra.mxu0 0.0
      %375 = vmatprep.subr.mxu0 0.0
      %376 = vmatpush1.msra.mxu0 0.0
      %377 = vmatprep.subr.mxu0 0.0
      %378 = vmatpush1.msra.mxu0 0.0
      %379 = vmatprep.subr.mxu0 0.0
      %380 = vmatpush1.msra.mxu0 0.0
      %381 = vmatprep.subr.mxu0 0.0
      %382 = vmatpush1.msra.mxu0 0.0
      %383 = vmatprep.subr.mxu0 0.0
      %384 = vmatpush1.msra.mxu0 0.0
      %385 = vmatprep.subr.mxu0 0.0
      %386 = vmatpush1.msra.mxu0 0.0
      %387 = vmatprep.subr.mxu0 0.0
      %388 = vmatpush1.msra.mxu0 0.0
      %389 = vmatprep.subr.mxu0 0.0
      %390 = vmatpush1.msra.mxu0 0.0
      %391 = vmatprep.subr.mxu0 0.0
      %392 = vmatpush1.msra.mxu0 0.0
      %393 = vmatprep.subr.mxu0 0.0
      %394 = vmatpush1.msra.mxu0 0.0
      %395 = vmatprep.subr.mxu0 0.0
      %396 = vmatpush1.msra.mxu0 0.0
      %397 = vmatprep.subr.mxu0 0.0
      %398 = vmatpush1.msra.mxu0 0.0
      %399 = vmatprep.subr.mxu0 0.0
      %400 = vmatpush1.msra.mxu0 0.0
      %401 = vmatprep.mubr.f32.mxu0 0.0
      %402 = vmatmul.mubr.f32.gmra.mrb[0].mxu0 %v331
      %v403 = vpop.f32.mrb[0].mxu0
      %v404 = vadd.f32 %v326, %v403
      %v405 = vpop.f32.mrb[0].mxu0
      %v406 = vadd.f32 %v326, %v405
      %407 = vdwg.mxu0
      %v410 = vcombine.low %v404, %v406
      %s412 = smul.addr %s319, 4
      %s413 = scalar_lea.vmem [#allocation5], %s412
      %414 = vst [vmem:[%s413] sm:$0xff] %v410
    $region37: #{tpu_custom_call.1} parent=1 // loop_footer
      %s318 = sadd.s32 1, %s314
    $region38: #{tpu_custom_call.1} parent=1 // loop_footer_branch
      %313 = sbr.rel target = $region34
    $region39: #{tpu_custom_call.1} parent=1 // loop_exit
      _
    // Predicated region
    $region40: #{tpu_custom_call.1} parent=1 // pred_check
      _
    $region41: #{tpu_custom_call.1} parent=1 // pred_check_branch
      %416 = sbr.rel (0) target = $region43
    $region42: #{tpu_custom_call.1} parent=1 // pred_region
      %s418 = ssub.s32 256, 256
      %419 = vsyncadd [#allocation4], %s418
      %s420 = sshll.u32 [#allocation5], 4
      %s421 = int_to_ptr.vmem [resolvable:$true] %s420
      %426 = dma.vmem_to_hbm [thread:$0]  %s421, 256, %s5, [#allocation4], 128, 128, 8
    $region43: #{tpu_custom_call.1} parent=1 // pred_fallthru
      _
    // Predicated region
    $region44: #{tpu_custom_call.1} parent=1 // pred_check
      _
    $region45: #{tpu_custom_call.1} parent=1 // pred_check_branch
      %428 = sbr.rel (0) target = $region47
    $region46: #{tpu_custom_call.1} parent=1 // pred_region
      %429 = dma.done [#allocation4], 256
    $region47: #{tpu_custom_call.1} parent=1 // pred_fallthru
      _
    %430 = vsyncpa [#allocation3], 1
    %431 = vsyncpa [#allocation4], 1

</llo_original>
